<compile_context>
chip_gen: v7x
topology: tpu7x:2x2x1
jax: 0.10.0
libtpu: 0.0.40
codegen_flags: <defaults>
</compile_context>

<pallas_src>
import jax
import jax.numpy as jnp
from jax.experimental import pallas as pl
from jax.experimental.pallas import tpu as pltpu


def xor_mlp_kernel(x_ref, p_ref, o_ref):
    # x_ref : (2, R, 128) f32 VMEM tile  (feature, sublane-rows, lanes)
    # p_ref : (17,) f32 SMEM  [w1(2x4) row-major | b1(4) | 0.5*w2(4) | 0.5*b2]
    # o_ref : (R, 128) f32 VMEM tile
    x0 = x_ref[0]            # (R, 128)  feature 0 across the batch tile
    x1 = x_ref[1]            # (R, 128)  feature 1 across the batch tile

    # Unrolled Linear(2,4) + ReLU + Linear(4,1): pure VPU elementwise math.
    z = None
    for j in range(4):
        h = x0 * p_ref[j] + x1 * p_ref[4 + j] + p_ref[8 + j]
        h = jnp.maximum(h, 0.0)
        term = h * p_ref[12 + j]          # w2 already pre-scaled by 0.5
        z = term if z is None else z + term
    z = z + p_ref[16]                     # b2 already pre-scaled by 0.5

    # sigmoid(2*z) == tanh(z)*0.5 + 0.5  (EUP tanh; co-issues with VPU work)
    o_ref[...] = jnp.tanh(z) * 0.5 + 0.5


def xor_gate_nn(x, w1, b1, w2, b2, *, max_rows=2048):
    """Pallas forward pass of XORGateNN.

    x  : (B, 2) float32
    w1 : (2, 4), b1 : (4,) or (1, 4)   (transposed vs. PyTorch's (out, in))
    w2 : (4, 1), b2 : (1,) or (1, 1)
    returns : (B, 1) float32  ==  sigmoid(relu(x @ w1 + b1) @ w2 + b2)
    """
    B = x.shape[0]

    # Batch maps to (rows, 128) dense tiles: lanes are the fast axis, the
    # sublane (row) axis carries the rest.  R capped so double-buffered tiles
    # stay well inside v5e's 16 MiB scoped-VMEM default (and v7x's 64 MiB).
    rows = pl.cdiv(B, 128)
    R = min(max_rows, rows)               # max_rows is a multiple of 8
    n_tiles = pl.cdiv(rows, R)
    rows_pad = n_tiles * R
    B_pad = rows_pad * 128

    # Feature-major, zero-padded, reshaped to (2, rows_pad, 128): one pad pass.
    # TODO(synk): if the producer can hand over feature-major (2, B) data this
    # transpose disappears entirely.
    xt = jnp.pad(x.astype(jnp.float32).T, ((0, 0), (0, B_pad - B)))
    xt = xt.reshape(2, rows_pad, 128)

    # Flatten the 17 parameters into one 1-D SMEM array; fold the sigmoid's
    # 0.5 scale into w2/b2.
    params = jnp.concatenate([
        w1.astype(jnp.float32).reshape(-1),            # [0:8]   w1[i, j] -> 4*i + j
        b1.astype(jnp.float32).reshape(-1),            # [8:12]
        0.5 * w2.astype(jnp.float32).reshape(-1),      # [12:16]
        0.5 * b2.astype(jnp.float32).reshape(-1),      # [16]
    ])

    out = pl.pallas_call(
        xor_mlp_kernel,
        out_shape=jax.ShapeDtypeStruct((rows_pad, 128), jnp.float32),
        grid_spec=pltpu.PrefetchScalarGridSpec(
            num_scalar_prefetch=0,
            grid=(n_tiles,),
            in_specs=[
                # x: pipelined dense (2, R, 128) batch tiles.
                pl.BlockSpec((2, R, 128), lambda i: (0, i, 0)),
                # Tiny flattened params stay resident in SMEM.
                pl.BlockSpec(memory_space=pltpu.MemorySpace.SMEM),
            ],
            out_specs=pl.BlockSpec((R, 128), lambda i: (i, 0)),
        ),
        compiler_params=pltpu.CompilerParams(
            dimension_semantics=("parallel",)),
    )(xt, params)

    # Layout-preserving unpack: (rows_pad, 128) -> (B_pad,) -> (B, 1).
    return out.reshape(B_pad)[:B].reshape(B, 1)


def init_params(key):
    """Deterministic init mimicking nn.Linear default: U(-1/sqrt(fan_in), .)."""
    k1, k2, k3, k4 = jax.random.split(key, 4)
    bound1 = 1.0 / jnp.sqrt(2.0)
    bound2 = 1.0 / jnp.sqrt(4.0)
    w1 = jax.random.uniform(k1, (2, 4), jnp.float32, -bound1, bound1)
    b1 = jax.random.uniform(k2, (4,), jnp.float32, -bound1, bound1)
    w2 = jax.random.uniform(k3, (4, 1), jnp.float32, -bound2, bound2)
    b2 = jax.random.uniform(k4, (1,), jnp.float32, -bound2, bound2)
    return w1, b1, w2, b2


if __name__ == "__main__":
    key = jax.random.PRNGKey(0)
    pkey, xkey = jax.random.split(key)
    w1, b1, w2, b2 = init_params(pkey)

    # Small batch of XOR-style inputs (B=8, features=2)
    base = jnp.array([[0., 0.], [0., 1.], [1., 0.], [1., 1.]], jnp.float32)
    noise = 0.01 * jax.random.normal(xkey, (8, 2), jnp.float32)
    x = jnp.concatenate([base, base], axis=0) + noise

    out = xor_gate_nn(x, w1, b1, w2, b2)
    jax.block_until_ready(out)

    # Reference check in plain JAX
    h_ref = jnp.maximum(x @ w1 + b1[None, :], 0.0)
    y_ref = jax.nn.sigmoid(h_ref @ w2 + b2[None, :])
    assert out.shape == (8, 1), out.shape
    assert jnp.allclose(out, y_ref, atol=1e-5), (out, y_ref)

    print("KERNEL_OK")
</pallas_src>

<mosaic_0001>
module attributes {stable_mosaic.version = 11 : i64} {
  func.func @xor_mlp_kernel(%arg0: i32, %arg1: memref<2x1x128xf32, #tpu.memory_space<vmem>>, %arg2: memref<17xf32, #tpu.memory_space<smem>>, %arg3: memref<1x128xf32, #tpu.memory_space<vmem>>) attributes {dimension_semantics = [#tpu.dimension_semantics<parallel>], iteration_bounds = array<i64: 1>, scalar_prefetch = 0 : i64, scratch_operands = 0 : i64, tpu.core_type = #tpu.core_type<tc>, window_params = [{transform_indices = @transform_0, window_bounds = array<i64: 2, 1, 128>}, {transform_indices = @transform_1, window_bounds = array<i64: 17>}, {transform_indices = @transform_2, window_bounds = array<i64: 1, 128>}]} {
    %c0 = arith.constant 0 : index
    %c0_0 = arith.constant 0 : index
    %c0_1 = arith.constant 0 : index
    %0 = vector.load %arg1[%c0, %c0_0, %c0_1] : memref<2x1x128xf32, #tpu.memory_space<vmem>>, vector<1x1x128xf32>
    %1 = vector.shape_cast %0 : vector<1x1x128xf32> to vector<1x128xf32>
    %c1 = arith.constant 1 : index
    %c0_2 = arith.constant 0 : index
    %c0_3 = arith.constant 0 : index
    %2 = vector.load %arg1[%c1, %c0_2, %c0_3] : memref<2x1x128xf32, #tpu.memory_space<vmem>>, vector<1x1x128xf32>
    %3 = vector.shape_cast %2 : vector<1x1x128xf32> to vector<1x128xf32>
    %c0_4 = arith.constant 0 : index
    %4 = memref.load %arg2[%c0_4] : memref<17xf32, #tpu.memory_space<smem>>
    %5 = vector.broadcast %4 : f32 to vector<1x128xf32>
    %6 = arith.mulf %1, %5 : vector<1x128xf32>
    %c4 = arith.constant 4 : index
    %7 = memref.load %arg2[%c4] : memref<17xf32, #tpu.memory_space<smem>>
    %8 = vector.broadcast %7 : f32 to vector<1x128xf32>
    %9 = arith.mulf %3, %8 : vector<1x128xf32>
    %10 = arith.addf %6, %9 : vector<1x128xf32>
    %c8 = arith.constant 8 : index
    %11 = memref.load %arg2[%c8] : memref<17xf32, #tpu.memory_space<smem>>
    %12 = vector.broadcast %11 : f32 to vector<1x128xf32>
    %13 = arith.addf %10, %12 : vector<1x128xf32>
    %cst = arith.constant 0.000000e+00 : f32
    %14 = vector.broadcast %cst : f32 to vector<1x128xf32>
    %15 = arith.maximumf %13, %14 : vector<1x128xf32>
    %c12 = arith.constant 12 : index
    %16 = memref.load %arg2[%c12] : memref<17xf32, #tpu.memory_space<smem>>
    %17 = vector.broadcast %16 : f32 to vector<1x128xf32>
    %18 = arith.mulf %15, %17 : vector<1x128xf32>
    %c1_5 = arith.constant 1 : index
    %19 = memref.load %arg2[%c1_5] : memref<17xf32, #tpu.memory_space<smem>>
    %20 = vector.broadcast %19 : f32 to vector<1x128xf32>
    %21 = arith.mulf %1, %20 : vector<1x128xf32>
    %c5 = arith.constant 5 : index
    %22 = memref.load %arg2[%c5] : memref<17xf32, #tpu.memory_space<smem>>
    %23 = vector.broadcast %22 : f32 to vector<1x128xf32>
    %24 = arith.mulf %3, %23 : vector<1x128xf32>
    %25 = arith.addf %21, %24 : vector<1x128xf32>
    %c9 = arith.constant 9 : index
    %26 = memref.load %arg2[%c9] : memref<17xf32, #tpu.memory_space<smem>>
    %27 = vector.broadcast %26 : f32 to vector<1x128xf32>
    %28 = arith.addf %25, %27 : vector<1x128xf32>
    %cst_6 = arith.constant 0.000000e+00 : f32
    %29 = vector.broadcast %cst_6 : f32 to vector<1x128xf32>
    %30 = arith.maximumf %28, %29 : vector<1x128xf32>
    %c13 = arith.constant 13 : index
    %31 = memref.load %arg2[%c13] : memref<17xf32, #tpu.memory_space<smem>>
    %32 = vector.broadcast %31 : f32 to vector<1x128xf32>
    %33 = arith.mulf %30, %32 : vector<1x128xf32>
    %34 = arith.addf %18, %33 : vector<1x128xf32>
    %c2 = arith.constant 2 : index
    %35 = memref.load %arg2[%c2] : memref<17xf32, #tpu.memory_space<smem>>
    %36 = vector.broadcast %35 : f32 to vector<1x128xf32>
    %37 = arith.mulf %1, %36 : vector<1x128xf32>
    %c6 = arith.constant 6 : index
    %38 = memref.load %arg2[%c6] : memref<17xf32, #tpu.memory_space<smem>>
    %39 = vector.broadcast %38 : f32 to vector<1x128xf32>
    %40 = arith.mulf %3, %39 : vector<1x128xf32>
    %41 = arith.addf %37, %40 : vector<1x128xf32>
    %c10 = arith.constant 10 : index
    %42 = memref.load %arg2[%c10] : memref<17xf32, #tpu.memory_space<smem>>
    %43 = vector.broadcast %42 : f32 to vector<1x128xf32>
    %44 = arith.addf %41, %43 : vector<1x128xf32>
    %cst_7 = arith.constant 0.000000e+00 : f32
    %45 = vector.broadcast %cst_7 : f32 to vector<1x128xf32>
    %46 = arith.maximumf %44, %45 : vector<1x128xf32>
    %c14 = arith.constant 14 : index
    %47 = memref.load %arg2[%c14] : memref<17xf32, #tpu.memory_space<smem>>
    %48 = vector.broadcast %47 : f32 to vector<1x128xf32>
    %49 = arith.mulf %46, %48 : vector<1x128xf32>
    %50 = arith.addf %34, %49 : vector<1x128xf32>
    %c3 = arith.constant 3 : index
    %51 = memref.load %arg2[%c3] : memref<17xf32, #tpu.memory_space<smem>>
    %52 = vector.broadcast %51 : f32 to vector<1x128xf32>
    %53 = arith.mulf %1, %52 : vector<1x128xf32>
    %c7 = arith.constant 7 : index
    %54 = memref.load %arg2[%c7] : memref<17xf32, #tpu.memory_space<smem>>
    %55 = vector.broadcast %54 : f32 to vector<1x128xf32>
    %56 = arith.mulf %3, %55 : vector<1x128xf32>
    %57 = arith.addf %53, %56 : vector<1x128xf32>
    %c11 = arith.constant 11 : index
    %58 = memref.load %arg2[%c11] : memref<17xf32, #tpu.memory_space<smem>>
    %59 = vector.broadcast %58 : f32 to vector<1x128xf32>
    %60 = arith.addf %57, %59 : vector<1x128xf32>
    %cst_8 = arith.constant 0.000000e+00 : f32
    %61 = vector.broadcast %cst_8 : f32 to vector<1x128xf32>
    %62 = arith.maximumf %60, %61 : vector<1x128xf32>
    %c15 = arith.constant 15 : index
    %63 = memref.load %arg2[%c15] : memref<17xf32, #tpu.memory_space<smem>>
    %64 = vector.broadcast %63 : f32 to vector<1x128xf32>
    %65 = arith.mulf %62, %64 : vector<1x128xf32>
    %66 = arith.addf %50, %65 : vector<1x128xf32>
    %c16 = arith.constant 16 : index
    %67 = memref.load %arg2[%c16] : memref<17xf32, #tpu.memory_space<smem>>
    %68 = vector.broadcast %67 : f32 to vector<1x128xf32>
    %69 = arith.addf %66, %68 : vector<1x128xf32>
    %70 = math.tanh %69 : vector<1x128xf32>
    %cst_9 = arith.constant 5.000000e-01 : f32
    %71 = vector.broadcast %cst_9 : f32 to vector<1x128xf32>
    %72 = arith.mulf %70, %71 : vector<1x128xf32>
    %cst_10 = arith.constant 5.000000e-01 : f32
    %73 = vector.broadcast %cst_10 : f32 to vector<1x128xf32>
    %74 = arith.addf %72, %73 : vector<1x128xf32>
    %c0_11 = arith.constant 0 : index
    %c0_12 = arith.constant 0 : index
    %75 = vector.load %arg3[%c0_11, %c0_12] : memref<1x128xf32, #tpu.memory_space<vmem>>, vector<1x128xf32>
    tpu.vector_store %arg3[%c0_11, %c0_12], %74 {strides = array<i32>} : memref<1x128xf32, #tpu.memory_space<vmem>>, vector<1x128xf32>,
    return
  }
  func.func @transform_0(%arg0: i32) -> (i32, i32, i32) {
    %c0_i32 = arith.constant 0 : i32
    %c0_i32_0 = arith.constant 0 : i32
    %c0_i32_1 = arith.constant 0 : i32
    return %c0_i32, %arg0, %c0_i32_0 : i32, i32, i32
  }
  func.func @transform_1(%arg0: i32) -> i32 {
    %c0_i32 = arith.constant 0 : i32
    %c0_i32_0 = arith.constant 0 : i32
    return %c0_i32 : i32
  }
  func.func @transform_2(%arg0: i32) -> (i32, i32) {
    %c0_i32 = arith.constant 0 : i32
    %c0_i32_0 = arith.constant 0 : i32
    return %arg0, %c0_i32 : i32, i32
  }
}

</mosaic_0001>

<llo_original>
// kernel: tpu_custom_call.1
$region0: #{tpu_custom_call.1}
  #allocation0 [shape = 'u32[]', space=smem, size = 0x4, offset = 0x4, fixed_abs, tag = 'smem constant byte address 0x4 - core index']
  #allocation1 [shape = 'u32[144,128]{1,0:T(1,128)}', space=vmem, size = 0x12000, scoped, tag = 'internal scratch']
  %s0 = inlined_call_operand.hbm [shape: f32[2,1,128], index: 0, kind: input, shape index: {}]
  %s1 = inlined_call_operand.vmem [shape: f32[17], index: 1, kind: input, shape index: {}]
  %s2 = inlined_call_operand.hbm [shape: f32[1,128], index: 2, kind: output, shape index: {}]
  %s3 = sld [smem:[#allocation0]]
  $region26: #{tpu_custom_call.1} parent=0
    _
  %s5 = ssub.s32 1, %s3
  %s6 = scalar_select 0, %s5, %s3
  $region1: #{tpu_custom_call.1} parent=0
    #allocation2 [shape = 'u8[1024]{0}', space=vmem, size = 0x400, scoped, tag = 'input window, operand 0, single buffered']
    #allocation3 [shape = 's32[1]{0}', space=sflag, size = 0x4, scoped, tag = 'scoped memory for tpu_custom_call.1']
    #allocation4 [shape = 's32[1]{0}', space=sflag, size = 0x4, scoped, tag = 'scoped memory for tpu_custom_call.1']
    #allocation5 [shape = 's32[1]{0}', space=sflag, size = 0x4, scoped, tag = 'scoped memory for tpu_custom_call.1']
    #allocation6 [shape = 'u8[512]{0}', space=smem, size = 0x200, scoped, tag = 'input window, operand 1, single buffered']
    #allocation7 [shape = 'u8[512]{0}', space=vmem, size = 0x400, scoped, tag = 'output window, operand 0, single buffered']
    %7 = vsyncpa [#allocation3], 0
    %8 = vsyncpa [#allocation5], 0
    %9 = vsyncpa [#allocation4], 0
    // Predicated region
    $region2: #{tpu_custom_call.1} parent=1 // pred_check
      _
    $region3: #{tpu_custom_call.1} parent=1 // pred_check_branch
      %11 = sbr.rel (0) target = $region5
    $region4: #{tpu_custom_call.1} parent=1 // pred_region
      %s13 = ssub.s32 32, 32
      %14 = vsyncadd [#allocation3], %s13
      %s15 = sshll.u32 [#allocation2], 4
      %s16 = int_to_ptr.vmem [resolvable:$true] %s15
      %21 = dma.hbm_to_vmem [thread:$0]  %s0, 32, %s16, [#allocation3], 16, 16, 1
    $region5: #{tpu_custom_call.1} parent=1 // pred_fallthru
      _
    // Predicated region
    $region6: #{tpu_custom_call.1} parent=1 // pred_check
      _
    $region7: #{tpu_custom_call.1} parent=1 // pred_check_branch
      %23 = sbr.rel (0) target = $region9
    $region8: #{tpu_custom_call.1} parent=1 // pred_region
      %s25 = ssub.s32 16, 16
      %26 = vsyncadd [#allocation5], %s25
      %s28 = sshll.u32 %s1, 4
      %s29 = int_to_ptr.vmem [resolvable:$true] %s28
      %31 = dma.vmem_to_smem %s29, 16, [#allocation6], [#allocation5]
    $region9: #{tpu_custom_call.1} parent=1 // pred_fallthru
      _
    // Predicated region
    $region10: #{tpu_custom_call.1} parent=1 // pred_check
      _
    $region11: #{tpu_custom_call.1} parent=1 // pred_check_branch
      %33 = sbr.rel (0) target = $region13
    $region12: #{tpu_custom_call.1} parent=1 // pred_region
      %34 = dma.done [#allocation3], 32
    $region13: #{tpu_custom_call.1} parent=1 // pred_fallthru
      _
    // Predicated region
    $region14: #{tpu_custom_call.1} parent=1 // pred_check
      _
    $region15: #{tpu_custom_call.1} parent=1 // pred_check_branch
      %36 = sbr.rel (0) target = $region17
    $region16: #{tpu_custom_call.1} parent=1 // pred_region
      %37 = dma.done [#allocation5], 16
    $region17: #{tpu_custom_call.1} parent=1 // pred_fallthru
      _
    %38 = sfence
    %v39 = vld [vmem:[#allocation2] sm:$0x1]
    %s40 = scalar_lea.vmem [#allocation2], 1
    %v41 = vld [vmem:[%s40] sm:$0x1]
    %s42 = sld [smem:[#allocation6]]
    %v43 = vstv %s42
    %v44 = vmul.f32 %v39, %v43
    %s45 = sld [smem:[#allocation6 + $0x4]]
    %v46 = vstv %s45
    %v47 = vmul.f32 %v41, %v46
    %v48 = vadd.f32 %v44, %v47
    %s49 = sld [smem:[#allocation6 + $0x8]]
    %v50 = vstv %s49
    %v51 = vadd.f32 %v48, %v50
    %v52 = vmax.f32 %v51, 0.0
    %s53 = sld [smem:[#allocation6 + $0xc]]
    %v54 = vstv %s53
    %v55 = vmul.f32 %v52, %v54
    %s56 = sld [smem:[#allocation6 + $0x1]]
    %v57 = vstv %s56
    %v58 = vmul.f32 %v39, %v57
    %s59 = sld [smem:[#allocation6 + $0x5]]
    %v60 = vstv %s59
    %v61 = vmul.f32 %v41, %v60
    %v62 = vadd.f32 %v58, %v61
    %s63 = sld [smem:[#allocation6 + $0x9]]
    %v64 = vstv %s63
    %v65 = vadd.f32 %v62, %v64
    %v66 = vmax.f32 %v65, 0.0
    %s67 = sld [smem:[#allocation6 + $0xd]]
    %v68 = vstv %s67
    %v69 = vmul.f32 %v66, %v68
    %v70 = vadd.f32 %v55, %v69
    %s71 = sld [smem:[#allocation6 + $0x2]]
    %v72 = vstv %s71
    %v73 = vmul.f32 %v39, %v72
    %s74 = sld [smem:[#allocation6 + $0x6]]
    %v75 = vstv %s74
    %v76 = vmul.f32 %v41, %v75
    %v77 = vadd.f32 %v73, %v76
    %s78 = sld [smem:[#allocation6 + $0xa]]
    %v79 = vstv %s78
    %v80 = vadd.f32 %v77, %v79
    %v81 = vmax.f32 %v80, 0.0
    %s82 = sld [smem:[#allocation6 + $0xe]]
    %v83 = vstv %s82
    %v84 = vmul.f32 %v81, %v83
    %v85 = vadd.f32 %v70, %v84
    %s86 = sld [smem:[#allocation6 + $0x3]]
    %v87 = vstv %s86
    %v88 = vmul.f32 %v39, %v87
    %s89 = sld [smem:[#allocation6 + $0x7]]
    %v90 = vstv %s89
    %v91 = vmul.f32 %v41, %v90
    %v92 = vadd.f32 %v88, %v91
    %s93 = sld [smem:[#allocation6 + $0xb]]
    %v94 = vstv %s93
    %v95 = vadd.f32 %v92, %v94
    %v96 = vmax.f32 %v95, 0.0
    %s97 = sld [smem:[#allocation6 + $0xf]]
    %v98 = vstv %s97
    %v99 = vmul.f32 %v96, %v98
    %v100 = vadd.f32 %v85, %v99
    %s101 = sld [smem:[#allocation6 + $0x10]]
    %v102 = vstv %s101
    %v103 = vadd.f32 %v100, %v102
    %v104 = vtanh.pop %v103
    %v105 = vmul.f32 %v104, 0.5
    %v106 = vadd.f32 %v105, 0.5
    %107 = vst [vmem:[#allocation7] sm:$0x1] %v106
    // Predicated region
    $region18: #{tpu_custom_call.1} parent=1 // pred_check
      _
    $region19: #{tpu_custom_call.1} parent=1 // pred_check_branch
      %109 = sbr.rel (0) target = $region21
    $region20: #{tpu_custom_call.1} parent=1 // pred_region
      %s111 = ssub.s32 16, 16
      %112 = vsyncadd [#allocation4], %s111
      %s114 = sshll.u32 [#allocation7], 4
      %s115 = int_to_ptr.vmem [resolvable:$true] %s114
      %117 = dma.vmem_to_hbm [thread:$0]  %s115, 16, %s2, [#allocation4]
    $region21: #{tpu_custom_call.1} parent=1 // pred_fallthru
      _
    // Predicated region
    $region22: #{tpu_custom_call.1} parent=1 // pred_check
      _
    $region23: #{tpu_custom_call.1} parent=1 // pred_check_branch
      %119 = sbr.rel (0) target = $region25
    $region24: #{tpu_custom_call.1} parent=1 // pred_region
      %120 = dma.done [#allocation4], 16
    $region25: #{tpu_custom_call.1} parent=1 // pred_fallthru
      _
    %121 = vsyncpa [#allocation3], 1
    %122 = vsyncpa [#allocation4], 1
    %123 = vsyncpa [#allocation5], 1

</llo_original>
